<compile_context>
chip_gen: v7x
topology: tpu7x:2x2x1
jax: 0.10.0
libtpu: 0.0.40
codegen_flags: <defaults>
</compile_context>

<pallas_src>
import functools

import jax
import jax.numpy as jnp
from jax.experimental import pallas as pl
from jax.experimental.pallas import tpu as pltpu

DEFAULT_LEAKY = 0.2                  # stand-in for args.leaky


def _round_up(x, m):
    return (x + m - 1) // m * m


def _pad_axis(a, size, axis):
    if a.shape[axis] == size:
        return a
    pads = [(0, 0)] * a.ndim
    pads[axis] = (0, size - a.shape[axis])
    return jnp.pad(a, pads)


@functools.lru_cache(maxsize=1)
def _vmem_limit_bytes():
    """Generation-aware VMEM budget (v5e/v6e: 128 MiB phys, v7x: 64 MiB)."""
    cap = 128 * 1024 * 1024
    try:
        cap = int(pltpu.get_tpu_info().vmem_capacity_bytes)
    except Exception:
        pass
    # Leave headroom for compiler-internal scratch:
    #   128 MiB parts -> 96 MiB, v7x 64 MiB parts -> 48 MiB.
    return min(cap * 3 // 4, 100 * 1024 * 1024)


def _sublane(dtype):
    # bf16 vregs pack (16,128); int8/fp8 pack (32,128); f32 packs (8,128).
    return {4: 8, 2: 16, 1: 32}.get(jnp.dtype(dtype).itemsize, 8)


def _apply_act(acc, act, slope):
    if act == "leakyrelu":
        return jnp.maximum(slope * acc, acc)
    if act == "sigmoid":
        return jax.nn.sigmoid(acc)
    return acc


# ----------------------------------------------------------------------------
# Generic tiled FC kernel:  out = act(x @ W [+ bias])
# ----------------------------------------------------------------------------
def _make_fc_kernel(has_bias, use_scratch, act, slope):
    def kernel(*refs):
        if use_scratch:
            *refs, acc_ref = refs
        x_ref, w_ref = refs[0], refs[1]
        b_ref = refs[2] if has_bias else None
        o_ref = refs[-1]
        if not use_scratch:
            acc_ref = o_ref          # f32 output block doubles as accumulator

        k = pl.program_id(2)

        @pl.when(k == 0)
        def _init():
            acc_ref[...] = jnp.zeros_like(acc_ref)

        acc_ref[...] += jnp.dot(
            x_ref[...], w_ref[...], preferred_element_type=jnp.float32
        ).astype(acc_ref.dtype)

        @pl.when(k == pl.num_programs(2) - 1)
        def _finalize():
            acc = acc_ref[...].astype(jnp.float32)
            if has_bias:
                acc = acc + b_ref[...].astype(jnp.float32)
            o_ref[...] = _apply_act(acc, act, slope).astype(o_ref.dtype)

    return kernel


def fc_forward(x, w, bias=None, act=None, slope=DEFAULT_LEAKY,
               tm=512, tn=512, tk=512, compute_dtype=jnp.bfloat16):
    """Pallas equivalent of FC.forward: act(x @ W [+ bias]).

    bf16 MXU inputs / f32 accumulation by default; pass compute_dtype=None
    (or jnp.float32) for full-precision inputs.
    """
    M, K = x.shape
    K2, N = w.shape
    assert K == K2
    out_dtype = x.dtype
    cdt = x.dtype if compute_dtype is None else compute_dtype
    sub = _sublane(cdt)

    # Big tiles amortize the ~0.35 us per-grid-step overhead; 512/256-wide
    # tk/tn also keep the 256-wide MXU on v6e/v7x fully fed.
    tm = min(tm, _round_up(M, sub))
    tn = min(tn, _round_up(N, 128))
    Kp = _round_up(K, 128)
    tk = min(tk, Kp)
    while Kp % tk:
        tk -= 128                     # keep tk | Kp (both multiples of 128)

    # Only the contraction axis needs host-side zero padding for correctness;
    # M/N edge blocks are masked by Pallas, so no out[:M, :N] slice either.
    x_p = _pad_axis(x, Kp, 1).astype(cdt)
    w_p = _pad_axis(w, Kp, 0).astype(cdt)

    grid = (pl.cdiv(M, tm), pl.cdiv(N, tn), Kp // tk)
    in_specs = [pl.BlockSpec((tm, tk), lambda i, j, k: (i, k)),
                pl.BlockSpec((tk, tn), lambda i, j, k: (k, j))]
    args = [x_p, w_p]
    has_bias = bias is not None
    if has_bias:
        in_specs.append(pl.BlockSpec((1, tn), lambda i, j, k: (0, j)))
        args.append(bias.reshape(1, N).astype(jnp.float32))

    # f32 outputs accumulate in place (output block resident across the
    # "arbitrary" k axis); non-f32 outputs keep an f32 VMEM scratch.
    use_scratch = out_dtype != jnp.float32
    scratch = [pltpu.VMEM((tm, tn), jnp.float32)] if use_scratch else []

    kernel = _make_fc_kernel(has_bias, use_scratch, act, slope)
    return pl.pallas_call(
        kernel,
        out_shape=jax.ShapeDtypeStruct((M, N), out_dtype),
        grid=grid,
        in_specs=in_specs,
        out_specs=pl.BlockSpec((tm, tn), lambda i, j, k: (i, j)),
        scratch_shapes=scratch,
        compiler_params=pltpu.CompilerParams(
            dimension_semantics=("parallel", "parallel", "arbitrary"),
            vmem_limit_bytes=_vmem_limit_bytes(),
        ),
    )(*args)


# ----------------------------------------------------------------------------
# Fused propagate hot path:
#   temlat2 = max(slope*(x@W1), x@W1) + x
#   temlat3 = max(slope*(temlat2@W2), temlat2@W2) + temlat2
# ----------------------------------------------------------------------------
def _fc_chain_kernel(x_ref, w1_ref, w2_ref, o_ref, *, slope):
    x = x_ref[...].astype(jnp.float32)
    h = jnp.dot(x_ref[...], w1_ref[...], preferred_element_type=jnp.float32)
    h = jnp.maximum(slope * h, h) + x                      # temlat2 (f32)
    g = jnp.dot(h.astype(w2_ref.dtype), w2_ref[...],
                preferred_element_type=jnp.float32)
    g = jnp.maximum(slope * g, g) + h                      # temlat3 (f32)
    o_ref[...] = g.astype(o_ref.dtype)


def fc_chain_forward(x, w1, w2, slope=DEFAULT_LEAKY, tm=256,
                     compute_dtype=jnp.bfloat16):
    M, K = x.shape
    assert w1.shape == (K, K) and w2.shape == (K, K)
    out_dtype = x.dtype
    cdt = x.dtype if compute_dtype is None else compute_dtype
    sub = _sublane(cdt)

    Kp = _round_up(K, 128)             # lane-dense hyperNum axis (zero-padded)
    # Guarantee a grid of extent >= 2 whenever possible so both of v7x's two
    # TensorCores get work; on v5e/v6e this just means one extra cheap step.
    if M > sub:
        n_blocks = max(2, pl.cdiv(M, tm))
        tm = _round_up(pl.cdiv(M, n_blocks), sub)
    else:
        tm = _round_up(M, sub)

    x_p = _pad_axis(x, Kp, 1).astype(cdt)
    w1_p = _pad_axis(_pad_axis(w1, Kp, 0), Kp, 1).astype(cdt)
    w2_p = _pad_axis(_pad_axis(w2, Kp, 0), Kp, 1).astype(cdt)

    # The weights have a constant index_map, so double-buffering them only
    # burns VMEM.  Drop to a single buffer once the footprint gets large
    # (matters on v7x's 64 MiB VMEM with big hyperNum).
    w_kwargs = {}
    w_bytes = Kp * Kp * jnp.dtype(cdt).itemsize
    if hasattr(pl, "Buffered") and 4 * w_bytes > _vmem_limit_bytes() // 4:
        w_kwargs["pipeline_mode"] = pl.Buffered(1)
    # TODO(synk): for very large hyperNum, tile the weights along K with an
    # inner pltpu.emit_pipeline instead of keeping both (Kp, Kp) blocks resident.

    out = pl.pallas_call(
        functools.partial(_fc_chain_kernel, slope=slope),
        out_shape=jax.ShapeDtypeStruct((M, Kp), out_dtype),
        grid=(pl.cdiv(M, tm),),
        in_specs=[
            pl.BlockSpec((tm, Kp), lambda i: (i, 0)),
            pl.BlockSpec((Kp, Kp), lambda i: (0, 0), **w_kwargs),  # resident
            pl.BlockSpec((Kp, Kp), lambda i: (0, 0), **w_kwargs),  # resident
        ],
        out_specs=pl.BlockSpec((tm, Kp), lambda i: (i, 0)),
        compiler_params=pltpu.CompilerParams(
            dimension_semantics=("parallel",),
            vmem_limit_bytes=_vmem_limit_bytes(),
        ),
    )(x_p, w1_p, w2_p)
    return out if Kp == K else out[:, :K]


def _fc_chain_xla(x, w1, w2, slope):
    h = x @ w1
    h = jnp.maximum(slope * h, h) + x
    g = h @ w2
    return jnp.maximum(slope * g, g) + h


# ----------------------------------------------------------------------------
# propagate.forward
# ----------------------------------------------------------------------------
def propagate_forward(V, lat, key_t, hyper, W_fc1, W_fc2, *, att_head, leaky,
                      use_pallas=None, compute_dtype=jnp.bfloat16):
    latdim = lat.shape[1]
    dh = latdim // att_head

    # TODO(synk): per-head einsums below have dh (= latdim/att_head) << 128
    # lanes; they are left to XLA rather than forced into lane-sparse Pallas.
    lstlat = jnp.transpose((lat @ V).reshape(-1, att_head, dh), (1, 2, 0))   # [H,dh,N]
    temlat1 = lstlat @ key_t                                                 # [H,dh,dh]
    hyp = jnp.transpose(hyper.reshape(-1, att_head, dh), (1, 2, 0))          # [H,dh,Hn]
    temlat1 = (temlat1 @ hyp).reshape(latdim, -1)                            # [latdim,Hn]

    M, K = temlat1.shape
    if use_pallas is None:
        # At propagate's typical sizes (latdim~32, hyperNum~64) the pallas_call
        # dispatch + pad/slice overhead dominates; let XLA fuse the tiny chain.
        use_pallas = M >= 128 and K >= 128
    if use_pallas:
        # fc1 + residual + fc2 + residual fused into ONE Pallas kernel.
        temlat3 = fc_chain_forward(temlat1, W_fc1, W_fc2, slope=leaky,
                                   compute_dtype=compute_dtype)
    else:
        temlat3 = _fc_chain_xla(temlat1, W_fc1, W_fc2, leaky)
    # TODO(synk): at large shapes the temlat1 producer / downstream projection
    # could also be fused into the same kernel to amortize dispatch further.

    preNewLat = jnp.transpose((temlat3.T @ V).reshape(-1, att_head, dh), (1, 0, 2))
    preNewLat = hyp @ preNewLat                                              # [H,dh,dh]
    newLat = key_t @ preNewLat                                               # [H,N,dh]
    return jnp.transpose(newLat, (1, 0, 2)).reshape(-1, latdim)              # [N,latdim]


def propagate_reference(V, lat, key_t, hyper, W_fc1, W_fc2, *, att_head, leaky):
    """Pure-JAX reference with identical math (FC layers un-fused)."""
    latdim = lat.shape[1]
    dh = latdim // att_head
    lstlat = jnp.transpose((lat @ V).reshape(-1, att_head, dh), (1, 2, 0))
    temlat1 = lstlat @ key_t
    hyp = jnp.transpose(hyper.reshape(-1, att_head, dh), (1, 2, 0))
    temlat1 = (temlat1 @ hyp).reshape(latdim, -1)

    h1 = temlat1 @ W_fc1
    temlat2 = jnp.maximum(leaky * h1, h1) + temlat1
    h2 = temlat2 @ W_fc2
    temlat3 = jnp.maximum(leaky * h2, h2) + temlat2

    preNewLat = jnp.transpose((temlat3.T @ V).reshape(-1, att_head, dh), (1, 0, 2))
    preNewLat = hyp @ preNewLat
    newLat = key_t @ preNewLat
    return jnp.transpose(newLat, (1, 0, 2)).reshape(-1, latdim)


def xavier_normal(key, fan_in, fan_out, dtype=jnp.float32):
    std = jnp.sqrt(2.0 / (fan_in + fan_out))
    return std * jax.random.normal(key, (fan_in, fan_out), dtype=dtype)


def _rel_err(a, b):
    a = jnp.asarray(a, jnp.float32)
    b = jnp.asarray(b, jnp.float32)
    return float(jnp.max(jnp.abs(a - b)) / (jnp.max(jnp.abs(b)) + 1e-12))


if __name__ == "__main__":
    key = jax.random.PRNGKey(0)
    ks = jax.random.split(key, 12)

    # --- propagate at the module's (small) shapes ---------------------------
    n_nodes, latdim, att_head, hyperNum, leaky = 16, 32, 4, 64, 0.2
    dh = latdim // att_head

    V = jax.random.normal(ks[0], (latdim, latdim), dtype=jnp.float32)
    lat0 = jax.random.normal(ks[1], (n_nodes, latdim), dtype=jnp.float32)
    key_t = jax.random.normal(ks[2], (att_head, n_nodes, dh), dtype=jnp.float32)
    hyper = jax.random.normal(ks[3], (hyperNum, latdim), dtype=jnp.float32)
    W_fc1 = xavier_normal(ks[4], hyperNum, hyperNum)   # FC(hyperNum, hyperNum), bias=False
    W_fc2 = xavier_normal(ks[5], hyperNum, hyperNum)

    # Exact-f32 reference only (precision is NOT set globally).
    with jax.default_matmul_precision("highest"):
        ref = jax.block_until_ready(
            propagate_reference(V, lat0, key_t, hyper, W_fc1, W_fc2,
                                att_head=att_head, leaky=leaky))

    lats = [lat0]
    out_auto = propagate_forward(V, lats[-1], key_t, hyper, W_fc1, W_fc2,
                                 att_head=att_head, leaky=leaky)   # auto -> XLA chain
    lats.append(out_auto)
    out_pl_f32 = propagate_forward(V, lat0, key_t, hyper, W_fc1, W_fc2,
                                   att_head=att_head, leaky=leaky,
                                   use_pallas=True, compute_dtype=jnp.float32)
    out_pl_bf16 = propagate_forward(V, lat0, key_t, hyper, W_fc1, W_fc2,
                                    att_head=att_head, leaky=leaky,
                                    use_pallas=True)               # bf16-in/f32-acc
    jax.block_until_ready((out_auto, out_pl_f32, out_pl_bf16))

    assert out_auto.shape == (n_nodes, latdim)
    assert _rel_err(out_auto, ref) < 5e-2
    assert _rel_err(out_pl_f32, ref) < 5e-2
    assert _rel_err(out_pl_bf16, ref) < 1e-1     # bf16-rounded residual input

    # --- fused fc1+fc2 chain at a size where the Pallas path is the win -----
    Mc, Kc = 256, 512
    xc = jax.random.normal(ks[6], (Mc, Kc), dtype=jnp.float32)
    w1c = xavier_normal(ks[7], Kc, Kc)
    w2c = xavier_normal(ks[8], Kc, Kc)
    with jax.default_matmul_precision("highest"):
        refc = jax.block_until_ready(_fc_chain_xla(xc, w1c, w2c, leaky))
    outc_f32 = fc_chain_forward(xc, w1c, w2c, slope=leaky, compute_dtype=jnp.float32)
    outc_bf16 = fc_chain_forward(xc, w1c, w2c, slope=leaky)
    jax.block_until_ready((outc_f32, outc_bf16))
    assert _rel_err(outc_f32, refc) < 2e-2
    assert _rel_err(outc_bf16, refc) < 6e-2

    # --- standalone FC kernel: non-tile-multiple M/N edges, bias variants ---
    Mf, Kf, Nf = 384, 512, 320
    xf = jax.random.normal(ks[9], (Mf, Kf), dtype=jnp.float32)
    wf = xavier_normal(ks[10], Kf, Nf)
    bf = jnp.zeros((Nf,), dtype=jnp.float32)           # nn.init.zeros_
    with jax.default_matmul_precision("highest"):
        ref_mm = jax.block_until_ready(xf @ wf)

    out_nb = fc_forward(xf, wf, act="leakyrelu", slope=leaky)           # bf16 compute
    out_b = fc_forward(xf, wf, bias=bf, act="sigmoid",
                       compute_dtype=jnp.float32)                       # f32 compute
    out_lo = fc_forward(xf.astype(jnp.bfloat16), wf.astype(jnp.bfloat16))  # bf16 out (scratch acc)
    jax.block_until_ready((out_nb, out_b, out_lo))

    assert _rel_err(out_nb, jnp.maximum(leaky * ref_mm, ref_mm)) < 5e-2
    assert _rel_err(out_b, jax.nn.sigmoid(ref_mm + bf)) < 2e-2
    assert out_lo.dtype == jnp.bfloat16
    assert _rel_err(out_lo, ref_mm) < 6e-2

    print("KERNEL_OK")
</pallas_src>

<mosaic_0001>
module attributes {stable_mosaic.version = 11 : i64} {
  func.func @_fc_chain_kernel(%arg0: i32, %arg1: memref<16x128xf32, #tpu.memory_space<vmem>>, %arg2: memref<128x128xf32, #tpu.memory_space<vmem>>, %arg3: memref<128x128xf32, #tpu.memory_space<vmem>>, %arg4: memref<16x128xf32, #tpu.memory_space<vmem>>) attributes {dimension_semantics = [#tpu.dimension_semantics<parallel>], iteration_bounds = array<i64: 2>, scalar_prefetch = 0 : i64, scratch_operands = 0 : i64, tpu.core_type = #tpu.core_type<tc>, window_params = [{transform_indices = @transform_0, window_bounds = array<i64: 16, 128>}, {pipeline_mode = #tpu.pipeline_mode<synchronous>, transform_indices = @transform_1, window_bounds = array<i64: 128, 128>}, {pipeline_mode = #tpu.pipeline_mode<synchronous>, transform_indices = @transform_2, window_bounds = array<i64: 128, 128>}, {transform_indices = @transform_3, window_bounds = array<i64: 16, 128>}]} {
    %c0 = arith.constant 0 : index
    %c0_0 = arith.constant 0 : index
    %0 = vector.load %arg1[%c0, %c0_0] : memref<16x128xf32, #tpu.memory_space<vmem>>, vector<16x128xf32>
    %c0_1 = arith.constant 0 : index
    %c0_2 = arith.constant 0 : index
    %1 = vector.load %arg1[%c0_1, %c0_2] : memref<16x128xf32, #tpu.memory_space<vmem>>, vector<16x128xf32>
    %c0_3 = arith.constant 0 : index
    %c0_4 = arith.constant 0 : index
    %2 = vector.load %arg2[%c0_3, %c0_4] : memref<128x128xf32, #tpu.memory_space<vmem>>, vector<128x128xf32>
    %cst = arith.constant dense<0.000000e+00> : vector<16x128xf32>
    %3 = tpu.matmul %1, %2, %cst {dimension_numbers = #tpu.dot_dimension_numbers<[1], [0], [0], [1], [0, 0, 1, 1], [], []>} : vector<16x128xf32>, vector<128x128xf32>, vector<16x128xf32> -> vector<16x128xf32>
    %cst_5 = arith.constant 2.000000e-01 : f32
    %4 = vector.broadcast %cst_5 : f32 to vector<16x128xf32>
    %5 = arith.mulf %4, %3 : vector<16x128xf32>
    %6 = arith.maximumf %5, %3 : vector<16x128xf32>
    %7 = arith.addf %6, %0 : vector<16x128xf32>
    %c0_6 = arith.constant 0 : index
    %c0_7 = arith.constant 0 : index
    %8 = vector.load %arg3[%c0_6, %c0_7] : memref<128x128xf32, #tpu.memory_space<vmem>>, vector<128x128xf32>
    %cst_8 = arith.constant dense<0.000000e+00> : vector<16x128xf32>
    %9 = tpu.matmul %7, %8, %cst_8 {dimension_numbers = #tpu.dot_dimension_numbers<[1], [0], [0], [1], [0, 0, 1, 1], [], []>} : vector<16x128xf32>, vector<128x128xf32>, vector<16x128xf32> -> vector<16x128xf32>
    %cst_9 = arith.constant 2.000000e-01 : f32
    %10 = vector.broadcast %cst_9 : f32 to vector<16x128xf32>
    %11 = arith.mulf %10, %9 : vector<16x128xf32>
    %12 = arith.maximumf %11, %9 : vector<16x128xf32>
    %13 = arith.addf %12, %7 : vector<16x128xf32>
    %c0_10 = arith.constant 0 : index
    %c0_11 = arith.constant 0 : index
    %14 = vector.load %arg4[%c0_10, %c0_11] : memref<16x128xf32, #tpu.memory_space<vmem>>, vector<16x128xf32>
    tpu.vector_store %arg4[%c0_10, %c0_11], %13 {strides = array<i32>} : memref<16x128xf32, #tpu.memory_space<vmem>>, vector<16x128xf32>,
    return
  }
  func.func @transform_0(%arg0: i32) -> (i32, i32) {
    %c0_i32 = arith.constant 0 : i32
    %c0_i32_0 = arith.constant 0 : i32
    return %arg0, %c0_i32 : i32, i32
  }
  func.func @transform_1(%arg0: i32) -> (i32, i32) {
    %c0_i32 = arith.constant 0 : i32
    %c0_i32_0 = arith.constant 0 : i32
    %c0_i32_1 = arith.constant 0 : i32
    return %c0_i32, %c0_i32_0 : i32, i32
  }
  func.func @transform_2(%arg0: i32) -> (i32, i32) {
    %c0_i32 = arith.constant 0 : i32
    %c0_i32_0 = arith.constant 0 : i32
    %c0_i32_1 = arith.constant 0 : i32
    return %c0_i32, %c0_i32_0 : i32, i32
  }
  func.func @transform_3(%arg0: i32) -> (i32, i32) {
    %c0_i32 = arith.constant 0 : i32
    %c0_i32_0 = arith.constant 0 : i32
    return %arg0, %c0_i32 : i32, i32
  }
}

</mosaic_0001>

<llo_original>
// kernel: tpu_custom_call.1
$region0: #{tpu_custom_call.1}
  #allocation0 [shape = 'u32[]', space=smem, size = 0x4, offset = 0x4, fixed_abs, tag = 'smem constant byte address 0x4 - core index']
  #allocation1 [shape = 'u32[144,128]{1,0:T(1,128)}', space=vmem, size = 0x12000, scoped, tag = 'internal scratch']
  %s0 = inlined_call_operand.hbm [shape: f32[32,128], index: 0, kind: input, shape index: {}]
  %s1 = inlined_call_operand.hbm [shape: f32[128,128], index: 1, kind: input, shape index: {}]
  %s2 = inlined_call_operand.hbm [shape: f32[128,128], index: 2, kind: input, shape index: {}]
  %s3 = inlined_call_operand.hbm [shape: f32[32,128], index: 3, kind: output, shape index: {}]
  %s4 = sld [smem:[#allocation0]]
  $region57: #{tpu_custom_call.1} parent=0
    _
  %s6 = ssub.s32 1, %s4
  %s7 = scalar_select 0, %s6, %s4
  $region1: #{tpu_custom_call.1} parent=0
    #allocation2 [shape = 'u8[16384]{0}', space=vmem, size = 0x4000, scoped, tag = 'input window, operand 0']
    #allocation3 [shape = 's32[2]{0}', space=sflag, size = 0x8, scoped, tag = 'scoped memory for tpu_custom_call.1']
    #allocation4 [shape = 's32[2]{0}', space=sflag, size = 0x8, scoped, tag = 'scoped memory for tpu_custom_call.1']
    #allocation5 [shape = 'u8[65536]{0}', space=vmem, size = 0x10000, scoped, tag = 'input window, operand 1, single buffered']
    #allocation6 [shape = 's32[1]{0}', space=sflag, size = 0x4, scoped, tag = 'scoped memory for tpu_custom_call.1']
    #allocation7 [shape = 'u8[65536]{0}', space=vmem, size = 0x10000, scoped, tag = 'input window, operand 2, single buffered']
    #allocation8 [shape = 'u8[16384]{0}', space=vmem, size = 0x4000, scoped, tag = 'output window, operand 0']
    %8 = vsyncpa [#allocation3], 0
    %s9 = scalar_lea.sflag [#allocation3], 1
    %10 = vsyncpa %s9, 0
    %11 = vsyncpa [#allocation6], 0
    %12 = vsyncpa [#allocation4], 0
    %s13 = scalar_lea.sflag [#allocation4], 1
    %14 = vsyncpa %s13, 0
    loop: start=0, step=1, limit=4
    $region2: #{tpu_custom_call.1} parent=1 // loop_pre_header
      _
    $region3: #{tpu_custom_call.1} parent=1 // loop_header
      %s16 = sphi 0, %s20
      %p17 = scmp.ge.s32.totalorder %s16, 4
      %s26 = sphi 0, %s28
      %s29 = sphi 0, %s26
      %s30 = sphi 0, %s29
      %s46 = sphi 0, %s30
      %s50 = sphi 0, %s50
      %s52 = sphi 0, %s50
      %s53 = sphi 0, %s52
      %s67 = sphi 0, %s53
      %s71 = sphi 0, %s71
      %s73 = sphi 0, %s71
      %s74 = sphi 0, %s73
      %s88 = sphi 0, %s74
      %s94 = sphi 0, %s96
      %s97 = sphi 0, %s94
      %s98 = sphi 0, %s97
      %s114 = sphi 0, %s98
    $region4: #{tpu_custom_call.1} parent=1 // loop_header_branch
      %19 = sbr.rel (%p17) target = $region8
    $region5: #{tpu_custom_call.1} parent=1 // loop_body
      %s21 = ssub.s32 %s16, 1
      %s22 = ssub.s32 %s16, 2
      %s23 = sadd.s32 %s16, 1
      %s24 = ssub.s32 %s16, %s23
      %p25 = scmp.eq.s32.totalorder %s24, 0
      %s27 = sadd.s32 %s26, 1
      %s28 = scalar_select %p25, %s26, %s27
      %p31 = pneg %p25
      %p32 = scmp.eq.s32.totalorder %s16, 1
      %p33 = por %p31, %p32
      %p34 = scmp.ne.s32.totalorder %s26, %s29
      %p35 = scmp.eq.s32.totalorder %s16, 0
      %p36 = por %p34, %p35
      %p37 = scmp.ne.s32.totalorder %s26, %s29
      %p38 = scmp.eq.s32.totalorder %s21, 1
      %p39 = por %p37, %p38
      %p40 = scmp.ne.s32.totalorder %s29, %s30
      %p41 = scmp.eq.s32.totalorder %s21, 0
      %p42 = por %p40, %p41
      %p43 = scmp.ne.s32.totalorder %s29, %s30
      %p44 = scmp.eq.s32.totalorder %s22, 1
      %p45 = por %p43, %p44
      %p47 = scmp.ne.s32.totalorder %s30, %s46
      %p48 = scmp.eq.s32.totalorder %s22, 0
      %p49 = por %p47, %p48
      %s51 = sadd.s32 %s50, 1
      %p54 = scmp.eq.s32.totalorder %s16, 1
      %p55 = scmp.ne.s32.totalorder %s50, %s52
      %p56 = scmp.eq.s32.totalorder %s16, 0
      %p57 = por %p55, %p56
      %p58 = scmp.ne.s32.totalorder %s50, %s52
      %p59 = scmp.eq.s32.totalorder %s21, 1
      %p60 = por %p58, %p59
      %p61 = scmp.ne.s32.totalorder %s52, %s53
      %p62 = scmp.eq.s32.totalorder %s21, 0
      %p63 = por %p61, %p62
      %p64 = scmp.ne.s32.totalorder %s52, %s53
      %p65 = scmp.eq.s32.totalorder %s22, 1
      %p66 = por %p64, %p65
      %p68 = scmp.ne.s32.totalorder %s53, %s67
      %p69 = scmp.eq.s32.totalorder %s22, 0
      %p70 = por %p68, %p69
      %s72 = sadd.s32 %s71, 1
      %p75 = scmp.eq.s32.totalorder %s16, 1
      %p76 = scmp.ne.s32.totalorder %s71, %s73
      %p77 = scmp.eq.s32.totalorder %s16, 0
      %p78 = por %p76, %p77
      %p79 = scmp.ne.s32.totalorder %s71, %s73
      %p80 = scmp.eq.s32.totalorder %s21, 1
      %p81 = por %p79, %p80
      %p82 = scmp.ne.s32.totalorder %s73, %s74
      %p83 = scmp.eq.s32.totalorder %s21, 0
      %p84 = por %p82, %p83
      %p85 = scmp.ne.s32.totalorder %s73, %s74
      %p86 = scmp.eq.s32.totalorder %s22, 1
      %p87 = por %p85, %p86
      %p89 = scmp.ne.s32.totalorder %s74, %s88
      %p90 = scmp.eq.s32.totalorder %s22, 0
      %p91 = por %p89, %p90
      %s92 = ssub.s32 %s16, %s23
      %p93 = scmp.eq.s32.totalorder %s92, 0
      %s95 = sadd.s32 %s94, 1
      %s96 = scalar_select %p93, %s94, %s95
      %p99 = pneg %p93
      %p100 = scmp.eq.s32.totalorder %s16, 1
      %p101 = por %p99, %p100
      %p102 = scmp.ne.s32.totalorder %s94, %s97
      %p103 = scmp.eq.s32.totalorder %s16, 0
      %p104 = por %p102, %p103
      %p105 = scmp.ne.s32.totalorder %s94, %s97
      %p106 = scmp.eq.s32.totalorder %s21, 1
      %p107 = por %p105, %p106
      %p108 = scmp.ne.s32.totalorder %s97, %s98
      %p109 = scmp.eq.s32.totalorder %s21, 0
      %p110 = por %p108, %p109
      %p111 = scmp.ne.s32.totalorder %s97, %s98
      %p112 = scmp.eq.s32.totalorder %s22, 1
      %p113 = por %p111, %p112
      %p115 = scmp.ne.s32.totalorder %s98, %s114
      %p116 = scmp.eq.s32.totalorder %s22, 0
      %p117 = por %p115, %p116
      %p118 = scmp.le.s32.totalorder 1, %s16
      %p119 = scmp.lt.s32.totalorder %s16, 3
      %p120 = pnand %p118, %p119
      %p121 = pneg %p120
      // Predicated region
      $region9: #{tpu_custom_call.1} parent=5 // pred_check
        _
      $region10: #{tpu_custom_call.1} parent=5 // pred_check_branch
        %123 = sbr.rel (%p120) target = $region12
      $region11: #{tpu_custom_call.1} parent=5 // pred_region
        %s124 = ssub.s32 %s16, 1
        // Predicated region
        $region13: #{tpu_custom_call.1} parent=11 // pred_check
          %p125 = pneg %p63
        $region14: #{tpu_custom_call.1} parent=11 // pred_check_branch
          %127 = sbr.rel (%p125) target = $region16
        $region15: #{tpu_custom_call.1} parent=11 // pred_region
          %s129 = ssub.s32 2048, 2048
          %130 = vsyncadd [#allocation6], %s129
          %s131 = sshll.u32 [#allocation5], 4
          %s132 = int_to_ptr.vmem [resolvable:$true] %s131
          %137 = dma.hbm_to_vmem [thread:$0]  %s1, 2048, %s132, [#allocation6], 128, 128, 8
        $region16: #{tpu_custom_call.1} parent=11 // pred_fallthru
          _
        // Predicated region
        $region17: #{tpu_custom_call.1} parent=11 // pred_check
          %p138 = pneg %p84
        $region18: #{tpu_custom_call.1} parent=11 // pred_check_branch
          %140 = sbr.rel (%p138) target = $region20
        $region19: #{tpu_custom_call.1} parent=11 // pred_region
          %s142 = ssub.s32 2048, 2048
          %143 = vsyncadd [#allocation6], %s142
          %s144 = sshll.u32 [#allocation7], 4
          %s145 = int_to_ptr.vmem [resolvable:$true] %s144
          %150 = dma.hbm_to_vmem [thread:$0]  %s2, 2048, %s145, [#allocation6], 128, 128, 8
        $region20: #{tpu_custom_call.1} parent=11 // pred_fallthru
          _
      $region12: #{tpu_custom_call.1} parent=5 // pred_fallthru
        _
      %p151 = scmp.lt.s32.totalorder %s16, 2
      // Predicated region
      $region21: #{tpu_custom_call.1} parent=5 // pred_check
        %p152 = pneg %p151
      $region22: #{tpu_custom_call.1} parent=5 // pred_check_branch
        %154 = sbr.rel (%p152) target = $region24
      $region23: #{tpu_custom_call.1} parent=5 // pred_region
        // Predicated region
        $region25: #{tpu_custom_call.1} parent=23 // pred_check
          %p155 = pneg %p36
        $region26: #{tpu_custom_call.1} parent=23 // pred_check_branch
          %157 = sbr.rel (%p155) target = $region28
        $region27: #{tpu_custom_call.1} parent=23 // pred_region
          %s158 = sand.u32 %s26, 1
          %s159 = scalar_lea.sflag [#allocation3], %s158
          %s160 = sand.u32 %s26, 1
          %s161 = smul.addr %s160, 16
          %s162 = scalar_lea.vmem [#allocation2], %s161
          %s163 = smul.u32 2, %s16
          %s165 = ssub.s32 256, 256
          %166 = vsyncadd %s159, %s165
          %s167 = smul.addr %s163, 128
          %s168 = scalar_lea.hbm %s0, %s167
          %s169 = sshll.u32 %s162, 4
          %s170 = int_to_ptr.vmem [resolvable:$true] %s169
          %175 = dma.hbm_to_vmem [thread:$0]  %s168, 256, %s170, %s159, 128, 128, 8
        $region28: #{tpu_custom_call.1} parent=23 // pred_fallthru
          _
      $region24: #{tpu_custom_call.1} parent=5 // pred_fallthru
        _
      %p176 = scmp.le.s32.totalorder 1, %s16
      %p177 = scmp.lt.s32.totalorder %s16, 3
      %p178 = pnand %p176, %p177
      %p179 = pneg %p178
      // Predicated region
      $region29: #{tpu_custom_call.1} parent=5 // pred_check
        _
      $region30: #{tpu_custom_call.1} parent=5 // pred_check_branch
        %181 = sbr.rel (%p178) target = $region32
      $region31: #{tpu_custom_call.1} parent=5 // pred_region
        %s182 = ssub.s32 %s16, 1
        %s183 = sand.u32 %s29, 1
        %s184 = scalar_lea.sflag [#allocation3], %s183
        %s185 = sand.u32 %s29, 1
        %s186 = smul.addr %s185, 16
        %s187 = scalar_lea.vmem [#allocation2], %s186
        // Predicated region
        $region33: #{tpu_custom_call.1} parent=31 // pred_check
          %p188 = pneg %p42
        $region34: #{tpu_custom_call.1} parent=31 // pred_check_branch
          %190 = sbr.rel (%p188) target = $region36
        $region35: #{tpu_custom_call.1} parent=31 // pred_region
          %191 = dma.done %s184, 256
        $region36: #{tpu_custom_call.1} parent=31 // pred_fallthru
          _
        // Predicated region
        $region37: #{tpu_custom_call.1} parent=31 // pred_check
          %p192 = pneg %p63
        $region38: #{tpu_custom_call.1} parent=31 // pred_check_branch
          %194 = sbr.rel (%p192) target = $region40
        $region39: #{tpu_custom_call.1} parent=31 // pred_region
          %195 = dma.done [#allocation6], 2048
        $region40: #{tpu_custom_call.1} parent=31 // pred_fallthru
          _
        // Predicated region
        $region41: #{tpu_custom_call.1} parent=31 // pred_check
          %p196 = pneg %p84
        $region42: #{tpu_custom_call.1} parent=31 // pred_check_branch
          %198 = sbr.rel (%p196) target = $region44
        $region43: #{tpu_custom_call.1} parent=31 // pred_region
          %199 = dma.done [#allocation6], 2048
        $region44: #{tpu_custom_call.1} parent=31 // pred_fallthru
          _
        %s200 = sand.u32 %s29, 1
        %s201 = scalar_lea.sflag [#allocation3], %s200
        %s202 = sand.u32 %s29, 1
        %s203 = smul.addr %s202, 16
        %s204 = scalar_lea.vmem [#allocation2], %s203
        %p205 = pneg %p42
        %p206 = pneg %p39
        %p207 = pneg %p63
        %p208 = pneg %p60
        %p209 = pneg %p84
        %p210 = pneg %p81
        %p211 = pneg %p110
        %p212 = pneg %p107
        %s213 = sand.u32 %s97, 1
        %s214 = scalar_lea.sflag [#allocation4], %s213
        %s215 = sand.u32 %s97, 1
        %s216 = smul.addr %s215, 16
        %s217 = scalar_lea.vmem [#allocation8], %s216
        %s218 = smul.u32 2, %s21
        %s219 = smul.u32 2, %s21
        %v220 = vld [vmem:[%s187] sm:$0xff]
        %v221 = vld [vmem:[%s187 + $0x8] sm:$0xff]
        %v222 = vld [vmem:[#allocation5] sm:$0xff]
        %v223 = vld [vmem:[#allocation5 + $0x8] sm:$0xff]
        %v224 = vld [vmem:[#allocation5 + $0x10] sm:$0xff]
        %v225 = vld [vmem:[#allocation5 + $0x18] sm:$0xff]
        %v226 = vld [vmem:[#allocation5 + $0x20] sm:$0xff]
        %v227 = vld [vmem:[#allocation5 + $0x28] sm:$0xff]
        %v228 = vld [vmem:[#allocation5 + $0x30] sm:$0xff]
        %v229 = vld [vmem:[#allocation5 + $0x38] sm:$0xff]
        %v230 = vld [vmem:[#allocation5 + $0x40] sm:$0xff]
        %v231 = vld [vmem:[#allocation5 + $0x48] sm:$0xff]
        %v232 = vld [vmem:[#allocation5 + $0x50] sm:$0xff]
        %v233 = vld [vmem:[#allocation5 + $0x58] sm:$0xff]
        %v234 = vld [vmem:[#allocation5 + $0x60] sm:$0xff]
        %v235 = vld [vmem:[#allocation5 + $0x68] sm:$0xff]
        %v236 = vld [vmem:[#allocation5 + $0x70] sm:$0xff]
        %v237 = vld [vmem:[#allocation5 + $0x78] sm:$0xff]
        %238 = vmatprep.subr.mxu0 0.0
        %239 = vmatpush1.msra.mxu0 %v222
        %240 = vmatprep.subr.mxu0 0.0
        %241 = vmatpush1.msra.mxu0 %v223
        %242 = vmatprep.subr.mxu0 0.0
        %243 = vmatpush1.msra.mxu0 %v224
        %244 = vmatprep.subr.mxu0 0.0
        %245 = vmatpush1.msra.mxu0 %v225
        %246 = vmatprep.subr.mxu0 0.0
        %247 = vmatpush1.msra.mxu0 %v226
        %248 = vmatprep.subr.mxu0 0.0
        %249 = vmatpush1.msra.mxu0 %v227
        %250 = vmatprep.subr.mxu0 0.0
        %251 = vmatpush1.msra.mxu0 %v228
        %252 = vmatprep.subr.mxu0 0.0
        %253 = vmatpush1.msra.mxu0 %v229
        %254 = vmatprep.subr.mxu0 0.0
        %255 = vmatpush1.msra.mxu0 %v230
        %256 = vmatprep.subr.mxu0 0.0
        %257 = vmatpush1.msra.mxu0 %v231
        %258 = vmatprep.subr.mxu0 0.0
        %259 = vmatpush1.msra.mxu0 %v232
        %260 = vmatprep.subr.mxu0 0.0
        %261 = vmatpush1.msra.mxu0 %v233
        %262 = vmatprep.subr.mxu0 0.0
        %263 = vmatpush1.msra.mxu0 %v234
        %264 = vmatprep.subr.mxu0 0.0
        %265 = vmatpush1.msra.mxu0 %v235
        %266 = vmatprep.subr.mxu0 0.0
        %267 = vmatpush1.msra.mxu0 %v236
        %268 = vmatprep.subr.mxu0 0.0
        %269 = vmatpush1.msra.mxu0 %v237
        %270 = vmatprep.subr.mxu0 0.0
        %271 = vmatpush1.msra.mxu0 0.0
        %272 = vmatprep.subr.mxu0 0.0
        %273 = vmatpush1.msra.mxu0 0.0
        %274 = vmatprep.subr.mxu0 0.0
        %275 = vmatpush1.msra.mxu0 0.0
        %276 = vmatprep.subr.mxu0 0.0
        %277 = vmatpush1.msra.mxu0 0.0
        %278 = vmatprep.subr.mxu0 0.0
        %279 = vmatpush1.msra.mxu0 0.0
        %280 = vmatprep.subr.mxu0 0.0
        %281 = vmatpush1.msra.mxu0 0.0
        %282 = vmatprep.subr.mxu0 0.0
        %283 = vmatpush1.msra.mxu0 0.0
        %284 = vmatprep.subr.mxu0 0.0
        %285 = vmatpush1.msra.mxu0 0.0
        %286 = vmatprep.subr.mxu0 0.0
        %287 = vmatpush1.msra.mxu0 0.0
        %288 = vmatprep.subr.mxu0 0.0
        %289 = vmatpush1.msra.mxu0 0.0
        %290 = vmatprep.subr.mxu0 0.0
        %291 = vmatpush1.msra.mxu0 0.0
        %292 = vmatprep.subr.mxu0 0.0
        %293 = vmatpush1.msra.mxu0 0.0
        %294 = vmatprep.subr.mxu0 0.0
        %295 = vmatpush1.msra.mxu0 0.0
        %296 = vmatprep.subr.mxu0 0.0
        %297 = vmatpush1.msra.mxu0 0.0
        %298 = vmatprep.subr.mxu0 0.0
        %299 = vmatpush1.msra.mxu0 0.0
        %300 = vmatprep.subr.mxu0 0.0
        %301 = vmatpush1.msra.mxu0 0.0
        %302 = vmatprep.mubr.f32.mxu0 0.0
        %303 = vmatmul.mubr.f32.gmra.mrb[0].mxu0 %v220
        %v304 = vpop.f32.mrb[0].mxu0
        %v305 = vadd.f32 0.0, %v304
        %v306 = vpop.f32.mrb[0].mxu0
        %307 = vmatprep.mubr.f32.mxu0 0.0
        %308 = vmatmul.mubr.f32.gmra.mrb[0].mxu0 %v221
        %v309 = vpop.f32.mrb[0].mxu0
        %v310 = vadd.f32 0.0, %v309
        %v311 = vpop.f32.mrb[0].mxu0
        %312 = vdwg.mxu0
        %v313 = vmul.f32 %v305, 0.2
        %v314 = vmul.f32 %v310, 0.2
        %v315 = vmax.f32 %v313, %v305
        %v316 = vmax.f32 %v314, %v310
        %v317 = vadd.f32 %v315, %v220
        %v318 = vadd.f32 %v316, %v221
        %v319 = vld [vmem:[#allocation7] sm:$0xff]
        %v320 = vld [vmem:[#allocation7 + $0x8] sm:$0xff]
        %v321 = vld [vmem:[#allocation7 + $0x10] sm:$0xff]
        %v322 = vld [vmem:[#allocation7 + $0x18] sm:$0xff]
        %v323 = vld [vmem:[#allocation7 + $0x20] sm:$0xff]
        %v324 = vld [vmem:[#allocation7 + $0x28] sm:$0xff]
        %v325 = vld [vmem:[#allocation7 + $0x30] sm:$0xff]
        %v326 = vld [vmem:[#allocation7 + $0x38] sm:$0xff]
        %v327 = vld [vmem:[#allocation7 + $0x40] sm:$0xff]
        %v328 = vld [vmem:[#allocation7 + $0x48] sm:$0xff]
        %v329 = vld [vmem:[#allocation7 + $0x50] sm:$0xff]
        %v330 = vld [vmem:[#allocation7 + $0x58] sm:$0xff]
        %v331 = vld [vmem:[#allocation7 + $0x60] sm:$0xff]
        %v332 = vld [vmem:[#allocation7 + $0x68] sm:$0xff]
        %v333 = vld [vmem:[#allocation7 + $0x70] sm:$0xff]
        %v334 = vld [vmem:[#allocation7 + $0x78] sm:$0xff]
        %335 = vmatprep.subr.mxu0 0.0
        %336 = vmatpush1.msra.mxu0 %v319
        %337 = vmatprep.subr.mxu0 0.0
        %338 = vmatpush1.msra.mxu0 %v320
        %339 = vmatprep.subr.mxu0 0.0
        %340 = vmatpush1.msra.mxu0 %v321
        %341 = vmatprep.subr.mxu0 0.0
        %342 = vmatpush1.msra.mxu0 %v322
        %343 = vmatprep.subr.mxu0 0.0
        %344 = vmatpush1.msra.mxu0 %v323
        %345 = vmatprep.subr.mxu0 0.0
        %346 = vmatpush1.msra.mxu0 %v324
        %347 = vmatprep.subr.mxu0 0.0
        %348 = vmatpush1.msra.mxu0 %v325
        %349 = vmatprep.subr.mxu0 0.0
        %350 = vmatpush1.msra.mxu0 %v326
        %351 = vmatprep.subr.mxu0 0.0
        %352 = vmatpush1.msra.mxu0 %v327
        %353 = vmatprep.subr.mxu0 0.0
        %354 = vmatpush1.msra.mxu0 %v328
        %355 = vmatprep.subr.mxu0 0.0
        %356 = vmatpush1.msra.mxu0 %v329
        %357 = vmatprep.subr.mxu0 0.0
        %358 = vmatpush1.msra.mxu0 %v330
        %359 = vmatprep.subr.mxu0 0.0
        %360 = vmatpush1.msra.mxu0 %v331
        %361 = vmatprep.subr.mxu0 0.0
        %362 = vmatpush1.msra.mxu0 %v332
        %363 = vmatprep.subr.mxu0 0.0
        %364 = vmatpush1.msra.mxu0 %v333
        %365 = vmatprep.subr.mxu0 0.0
        %366 = vmatpush1.msra.mxu0 %v334
        %367 = vmatprep.subr.mxu0 0.0
        %368 = vmatpush1.msra.mxu0 0.0
        %369 = vmatprep.subr.mxu0 0.0
        %370 = vmatpush1.msra.mxu0 0.0
        %371 = vmatprep.subr.mxu0 0.0
        %372 = vmatpush1.msra.mxu0 0.0
        %373 = vmatprep.subr.mxu0 0.0
        %374 = vmatpush1.msra.mxu0 0.0
        %375 = vmatprep.subr.mxu0 0.0
        %376 = vmatpush1.msra.mxu0 0.0
        %377 = vmatprep.subr.mxu0 0.0
        %378 = vmatpush1.msra.mxu0 0.0
        %379 = vmatprep.subr.mxu0 0.0
        %380 = vmatpush1.msra.mxu0 0.0
        %381 = vmatprep.subr.mxu0 0.0
        %382 = vmatpush1.msra.mxu0 0.0
        %383 = vmatprep.subr.mxu0 0.0
        %384 = vmatpush1.msra.mxu0 0.0
        %385 = vmatprep.subr.mxu0 0.0
        %386 = vmatpush1.msra.mxu0 0.0
        %387 = vmatprep.subr.mxu0 0.0
        %388 = vmatpush1.msra.mxu0 0.0
        %389 = vmatprep.subr.mxu0 0.0
        %390 = vmatpush1.msra.mxu0 0.0
        %391 = vmatprep.subr.mxu0 0.0
        %392 = vmatpush1.msra.mxu0 0.0
        %393 = vmatprep.subr.mxu0 0.0
        %394 = vmatpush1.msra.mxu0 0.0
        %395 = vmatprep.subr.mxu0 0.0
        %396 = vmatpush1.msra.mxu0 0.0
        %397 = vmatprep.subr.mxu0 0.0
        %398 = vmatpush1.msra.mxu0 0.0
        %399 = vmatprep.mubr.f32.mxu0 0.0
        %400 = vmatmul.mubr.f32.gmra.mrb[0].mxu0 %v317
        %v401 = vpop.f32.mrb[0].mxu0
        %v402 = vadd.f32 0.0, %v401
        %v403 = vpop.f32.mrb[0].mxu0
        %404 = vmatprep.mubr.f32.mxu0 0.0
        %405 = vmatmul.mubr.f32.gmra.mrb[0].mxu0 %v318
        %v406 = vpop.f32.mrb[0].mxu0
        %v407 = vadd.f32 0.0, %v406
        %v408 = vpop.f32.mrb[0].mxu0
        %409 = vdwg.mxu0
        %v410 = vmul.f32 %v402, 0.2
        %v411 = vmul.f32 %v407, 0.2
        %v412 = vmax.f32 %v410, %v402
        %v413 = vmax.f32 %v411, %v407
        %v414 = vadd.f32 %v412, %v317
        %v415 = vadd.f32 %v413, %v318
        %416 = vst [vmem:[%s217] sm:$0xff] %v414
        %417 = vst [vmem:[%s217 + $0x8] sm:$0xff] %v415
        %s418 = sand.u32 %s97, 1
        %s419 = scalar_lea.sflag [#allocation4], %s418
        %s420 = sand.u32 %s97, 1
        %s421 = smul.addr %s420, 16
        %s422 = scalar_lea.vmem [#allocation8], %s421
        // Predicated region
        $region45: #{tpu_custom_call.1} parent=31 // pred_check
          %p423 = pneg %p107
        $region46: #{tpu_custom_call.1} parent=31 // pred_check_branch
          %425 = sbr.rel (%p423) target = $region48
        $region47: #{tpu_custom_call.1} parent=31 // pred_region
          %s426 = smul.u32 2, %s21
          %s428 = ssub.s32 256, 256
          %429 = vsyncadd %s419, %s428
          %s430 = smul.addr %s426, 128
          %s431 = scalar_lea.hbm %s3, %s430
          %s432 = sshll.u32 %s422, 4
          %s433 = int_to_ptr.vmem [resolvable:$true] %s432
          %438 = dma.vmem_to_hbm [thread:$0]  %s433, 256, %s431, %s419, 128, 128, 8
        $region48: #{tpu_custom_call.1} parent=31 // pred_fallthru
          _
      $region32: #{tpu_custom_call.1} parent=5 // pred_fallthru
        _
      %p439 = scmp.le.s32.totalorder 2, %s16
      // Predicated region
      $region49: #{tpu_custom_call.1} parent=5 // pred_check
        %p440 = pneg %p439
      $region50: #{tpu_custom_call.1} parent=5 // pred_check_branch
        %442 = sbr.rel (%p440) target = $region52
      $region51: #{tpu_custom_call.1} parent=5 // pred_region
        %s443 = ssub.s32 %s16, 2
        // Predicated region
        $region53: #{tpu_custom_call.1} parent=51 // pred_check
          %p444 = pneg %p113
        $region54: #{tpu_custom_call.1} parent=51 // pred_check_branch
          %446 = sbr.rel (%p444) target = $region56
        $region55: #{tpu_custom_call.1} parent=51 // pred_region
          %s447 = sand.u32 %s98, 1
          %s448 = scalar_lea.sflag [#allocation4], %s447
          %s449 = sand.u32 %s98, 1
          %s450 = smul.addr %s449, 16
          %s451 = scalar_lea.vmem [#allocation8], %s450
          %452 = dma.done %s448, 256
        $region56: #{tpu_custom_call.1} parent=51 // pred_fallthru
          _
      $region52: #{tpu_custom_call.1} parent=5 // pred_fallthru
        _
    $region6: #{tpu_custom_call.1} parent=1 // loop_footer
      %s20 = sadd.s32 1, %s16
    $region7: #{tpu_custom_call.1} parent=1 // loop_footer_branch
      %15 = sbr.rel target = $region3
    $region8: #{tpu_custom_call.1} parent=1 // loop_exit
      _
    %453 = vsyncpa [#allocation3], 1
    %s454 = scalar_lea.sflag [#allocation3], 1
    %455 = vsyncpa %s454, 1
    %456 = vsyncpa [#allocation6], 1
    %457 = vsyncpa [#allocation4], 1
    %s458 = scalar_lea.sflag [#allocation4], 1
    %459 = vsyncpa %s458, 1

</llo_original>
